<compile_context>
chip_gen: v5e
topology: v5e:2x2
jax: 0.10.0
libtpu: 0.0.40
codegen_flags: <defaults>
</compile_context>

<pallas_src>
import jax
import jax.numpy as jnp
import numpy as np
from jax.experimental import pallas as pl
from jax.experimental.pallas import tpu as pltpu

LANES = 128


def _make_attention_kernel(sub_rows, n_sub):
    """Kernel closure over the (static) batch sub-block size and count."""

    def kernel(x_ref, w_ref, b_ref, o_ref):
        # x_ref : (TB, S, F)      batch tile of the input
        # w_ref : (F, LANES)      attention weight, replicated across lanes
        # b_ref : (1, S, LANES)   step bias, replicated across lanes
        # o_ref : (TB, F)         pooled output tile
        S = x_ref.shape[1]
        F = x_ref.shape[2]

        w = w_ref[...]                                          # (F, LANES)
        # Hoist the bias broadcast out of the loop (broadcast_in_dim is not CSE'd).
        b_b = jnp.broadcast_to(b_ref[...], (sub_rows, S, LANES))

        @pl.loop(0, n_sub)
        def _(i):
            off = pl.multiple_of(i * sub_rows, sub_rows)
            xs = x_ref[pl.ds(off, sub_rows)]                    # (SB, S, F)

            # ---- phase 1: eij on the MXU --------------------------------
            # Every column of w is identical, so every lane of `scores`
            # carries eij[b, s]; no lane broadcast is needed later.
            x2 = xs.reshape(sub_rows * S, F)                    # free collapse
            scores = jnp.dot(x2, w, preferred_element_type=jnp.float32)
            e = jnp.tanh(scores.reshape(sub_rows, S, LANES) + b_b)
            p = jnp.exp(e)                                      # (SB, S, LANES)

            # Softmax-style normalization over steps.  tanh bounds eij to
            # [-1, 1], so exp() without max-subtraction is safe (matches the
            # reference; revisit if the activation ever changes).
            denom = jnp.sum(p, axis=1, keepdims=True)           # (SB, 1, LANES)
            a = p / denom + 1e-10                               # exact division

            # ---- phase 2: weighted sum over steps, per 128-lane chunk ----
            # `a` is lane-replicated, so this is a pure VALU multiply plus a
            # sublane reduce over S; no (TB,S,F) temporary ever exists.
            for c0 in range(0, F, LANES):
                width = min(LANES, F - c0)
                xc = xs[:, :, c0:c0 + width]                    # (SB, S, width)
                ac = a if width == LANES else a[:, :, :width]
                oc = jnp.sum(xc * ac, axis=1)                   # (SB, width)
                o_ref[pl.ds(off, sub_rows), c0:c0 + width] = oc.astype(o_ref.dtype)

    return kernel


def _vmem_capacity_bytes():
    try:
        info = pltpu.get_tpu_info()
        cap = getattr(info, "vmem_capacity_bytes", None)
        if cap:
            return int(cap)
    except Exception:
        pass
    return 64 * 1024 * 1024   # conservative (v7x-class) fallback


def _pick_batch_tile(batch, max_rows):
    """Largest divisor of `batch` that fits the byte budget, keeps the
    (tb, F) output block legal (tb % 8 == 0 or tb == batch) and — when the
    batch allows — leaves an even grid of >= 2 steps (v7x megacore)."""
    max_rows = int(max(1, min(max_rows, batch)))
    divisors = [d for d in range(1, batch + 1) if batch % d == 0]
    legal = [d for d in divisors if d % 8 == 0 or d == batch]
    in_budget = [d for d in legal if d <= max_rows]
    even_grid = [d for d in in_budget if (batch // d) % 2 == 0]
    multi_step = [d for d in in_budget if batch // d >= 2]
    for tier in (even_grid, multi_step, in_budget, legal):
        if tier:
            return max(tier)
    return batch


def _pick_sub_block(tb, target=256):
    """Largest divisor of tb that is <= target and sublane aligned."""
    for d in range(min(target, tb), 0, -1):
        if tb % d == 0 and (d % 8 == 0 or d == tb):
            return d
    return tb


def attention_pallas(x, weight, bias):
    """x: (B, S, F) f32, weight: (F, 1) or (F,) f32, bias: (S,) f32 -> (B, F)."""
    B, S, F = x.shape
    dtype = x.dtype

    # Lane-replicated parameter layouts (tiny, resident in VMEM):
    #   w_rep[f, l] = weight[f]   -> MXU RHS, makes eij lane-replicated
    #   b_rep[0, s, l] = bias[s]  -> broadcast-add over the batch axis only
    w_rep = jnp.broadcast_to(weight.reshape(F, 1).astype(dtype), (F, LANES))
    b_rep = jnp.broadcast_to(bias.reshape(1, S, 1).astype(dtype), (1, S, LANES))

    # ---- byte-budgeted, generation-aware tiling --------------------------
    cap = _vmem_capacity_bytes()
    if cap <= 64 * 1024 * 1024:                    # v7x-class: 64 MiB physical
        vmem_limit = min(40 * 1024 * 1024, (cap * 3) // 4)
    else:                                          # v5e / v6e: 128 MiB physical
        vmem_limit = 64 * 1024 * 1024
    temp_budget = 8 * 1024 * 1024                  # in-kernel temps (bounded by sub-block)
    pipeline_budget = max(vmem_limit - temp_budget - 4 * 1024 * 1024,
                          4 * 1024 * 1024)
    row_bytes = (S * F + F) * dtype.itemsize       # one batch row of x + out
    max_rows = max(1, pipeline_budget // (2 * row_bytes))   # x2: double buffering

    tb = _pick_batch_tile(B, max_rows)
    sub_rows = _pick_sub_block(tb)
    n_sub = tb // sub_rows

    kernel = _make_attention_kernel(sub_rows, n_sub)

    # TODO(synk): if production F is far from a multiple of 128, pad the
    # feature axis in the wrapper so output stores stay lane-dense.
    return pl.pallas_call(
        kernel,
        out_shape=jax.ShapeDtypeStruct((B, F), dtype),
        grid_spec=pltpu.PrefetchScalarGridSpec(
            num_scalar_prefetch=0,
            grid=(B // tb,),
            in_specs=[
                pl.BlockSpec((tb, S, F), lambda b: (b, 0, 0)),      # x batch tile
                pl.BlockSpec((F, LANES), lambda b: (0, 0)),         # weight (resident)
                pl.BlockSpec((1, S, LANES), lambda b: (0, 0, 0)),   # bias (resident)
            ],
            out_specs=pl.BlockSpec((tb, F), lambda b: (b, 0)),
        ),
        compiler_params=pltpu.CompilerParams(
            dimension_semantics=("parallel",),
            vmem_limit_bytes=int(vmem_limit),
        ),
    )(x, w_rep, b_rep)


def attention_ref(x, weight, bias):
    """Pure-JAX reference mirroring the PyTorch forward exactly."""
    B, S, F = x.shape
    eij = (x.reshape(-1, F) @ weight.reshape(F, 1)).reshape(B, S)
    eij = jnp.tanh(eij + bias[None, :])
    a = jnp.exp(eij)
    a = a / jnp.sum(a, axis=1, keepdims=True) + 1e-10
    return jnp.sum(x * a[:, :, None], axis=1)


if __name__ == "__main__":
    # Small shapes consistent with the module: batch=16, step_dim=8,
    # feature_dim=128 (lane-aligned; batch gives an even 2-step grid).
    B, S, F = 16, 8, 128

    key = jax.random.PRNGKey(0)
    kx, kw = jax.random.split(key)

    x = jax.random.normal(kx, (B, S, F), dtype=jnp.float32)

    # Parameter init matching the module's __init__:
    #   weight: (feature_dim, 1), xavier_uniform_; bias: zeros(step_dim)
    xavier_bound = float(np.sqrt(6.0 / (F + 1)))
    weight = jax.random.uniform(kw, (F, 1), dtype=jnp.float32,
                                minval=-xavier_bound, maxval=xavier_bound)
    bias = jnp.zeros((S,), dtype=jnp.float32)

    out = attention_pallas(x, weight, bias)
    out = jax.block_until_ready(out)

    ref = attention_ref(x, weight, bias)
    # Tolerance covers the MXU's default-precision (bf16-operand) matmul pass
    # versus an f32-exact path, consistent with XLA's default handling of f32
    # matmuls on TPU; the softmax normalization itself is exact division now.
    np.testing.assert_allclose(np.asarray(out), np.asarray(ref),
                               rtol=5e-3, atol=5e-3)

    print("KERNEL_OK")
</pallas_src>

<mosaic_0001>
module attributes {stable_mosaic.version = 11 : i64} {
  func.func @kernel(%arg0: i32, %arg1: memref<8x8x128xf32, #tpu.memory_space<vmem>>, %arg2: memref<128x128xf32, #tpu.memory_space<vmem>>, %arg3: memref<1x8x128xf32, #tpu.memory_space<vmem>>, %arg4: memref<8x128xf32, #tpu.memory_space<vmem>>) attributes {dimension_semantics = [#tpu.dimension_semantics<parallel>], iteration_bounds = array<i64: 2>, scalar_prefetch = 0 : i64, scratch_operands = 0 : i64, tpu.core_type = #tpu.core_type<tc>, window_params = [{transform_indices = @transform_0, window_bounds = array<i64: 8, 8, 128>}, {pipeline_mode = #tpu.pipeline_mode<synchronous>, transform_indices = @transform_1, window_bounds = array<i64: 128, 128>}, {pipeline_mode = #tpu.pipeline_mode<synchronous>, transform_indices = @transform_2, window_bounds = array<i64: 1, 8, 128>}, {transform_indices = @transform_3, window_bounds = array<i64: 8, 128>}]} {
    %c0 = arith.constant 0 : index
    %c0_0 = arith.constant 0 : index
    %0 = vector.load %arg2[%c0, %c0_0] : memref<128x128xf32, #tpu.memory_space<vmem>>, vector<128x128xf32>
    %c0_1 = arith.constant 0 : index
    %c0_2 = arith.constant 0 : index
    %c0_3 = arith.constant 0 : index
    %1 = vector.load %arg3[%c0_1, %c0_2, %c0_3] : memref<1x8x128xf32, #tpu.memory_space<vmem>>, vector<1x8x128xf32>
    %2 = vector.shape_cast %1 : vector<1x8x128xf32> to vector<1x8x128xf32>
    %3 = vector.broadcast %2 : vector<1x8x128xf32> to vector<8x8x128xf32>
    %c0_i32 = arith.constant 0 : i32
    %c1_i32 = arith.constant 1 : i32
    %4 = arith.muli %c0_i32, %c1_i32 : i32
    %c0_i32_4 = arith.constant 0 : i32
    %5 = arith.addi %c0_i32_4, %4 : i32
    %c8_i32 = arith.constant 8 : i32
    %6 = arith.muli %5, %c8_i32 : i32
    %7 = tpu.assume_multiple %6, 8 : i32
    %8 = arith.index_cast %7 : i32 to index
    %c0_5 = arith.constant 0 : index
    %c0_6 = arith.constant 0 : index
    %9 = vector.load %arg1[%8, %c0_5, %c0_6] : memref<8x8x128xf32, #tpu.memory_space<vmem>>, vector<8x8x128xf32>
    %10 = vector.shape_cast %9 : vector<8x8x128xf32> to vector<64x128xf32>
    %cst = arith.constant dense<0.000000e+00> : vector<64x128xf32>
    %11 = tpu.matmul %10, %0, %cst {dimension_numbers = #tpu.dot_dimension_numbers<[1], [0], [0], [1], [0, 0, 1, 1], [], []>} : vector<64x128xf32>, vector<128x128xf32>, vector<64x128xf32> -> vector<64x128xf32>
    %12 = vector.shape_cast %11 : vector<64x128xf32> to vector<8x8x128xf32>
    %13 = arith.addf %12, %3 : vector<8x8x128xf32>
    %14 = math.tanh %13 : vector<8x8x128xf32>
    %15 = math.exp %14 : vector<8x8x128xf32>
    %cst_7 = arith.constant dense<0.000000e+00> : vector<8x128xf32>
    %16 = vector.multi_reduction <add>, %15, %cst_7 [1] : vector<8x8x128xf32> to vector<8x128xf32>
    %17 = vector.shape_cast %16 : vector<8x128xf32> to vector<8x1x128xf32>
    %18 = vector.broadcast %17 : vector<8x1x128xf32> to vector<8x8x128xf32>
    %19 = arith.divf %15, %18 : vector<8x8x128xf32>
    %cst_8 = arith.constant 1.000000e-10 : f32
    %20 = vector.broadcast %cst_8 : f32 to vector<8x8x128xf32>
    %21 = arith.addf %19, %20 : vector<8x8x128xf32>
    %22 = arith.mulf %9, %21 : vector<8x8x128xf32>
    %cst_9 = arith.constant dense<0.000000e+00> : vector<8x128xf32>
    %23 = vector.multi_reduction <add>, %22, %cst_9 [1] : vector<8x8x128xf32> to vector<8x128xf32>
    %24 = arith.index_cast %7 : i32 to index
    %c0_10 = arith.constant 0 : index
    %25 = vector.load %arg4[%24, %c0_10] : memref<8x128xf32, #tpu.memory_space<vmem>>, vector<8x128xf32>
    tpu.vector_store %arg4[%24, %c0_10], %23 {strides = array<i32>} : memref<8x128xf32, #tpu.memory_space<vmem>>, vector<8x128xf32>,
    %c1_i32_11 = arith.constant 1 : i32
    return
  }
  func.func @transform_0(%arg0: i32) -> (i32, i32, i32) {
    %c0_i32 = arith.constant 0 : i32
    %c0_i32_0 = arith.constant 0 : i32
    %c0_i32_1 = arith.constant 0 : i32
    return %arg0, %c0_i32, %c0_i32_0 : i32, i32, i32
  }
  func.func @transform_1(%arg0: i32) -> (i32, i32) {
    %c0_i32 = arith.constant 0 : i32
    %c0_i32_0 = arith.constant 0 : i32
    %c0_i32_1 = arith.constant 0 : i32
    return %c0_i32, %c0_i32_0 : i32, i32
  }
  func.func @transform_2(%arg0: i32) -> (i32, i32, i32) {
    %c0_i32 = arith.constant 0 : i32
    %c0_i32_0 = arith.constant 0 : i32
    %c0_i32_1 = arith.constant 0 : i32
    %c0_i32_2 = arith.constant 0 : i32
    return %c0_i32, %c0_i32_0, %c0_i32_1 : i32, i32, i32
  }
  func.func @transform_3(%arg0: i32) -> (i32, i32) {
    %c0_i32 = arith.constant 0 : i32
    %c0_i32_0 = arith.constant 0 : i32
    return %arg0, %c0_i32 : i32, i32
  }
}

</mosaic_0001>

<llo_original>
// kernel: tpu_custom_call.1
$region0: #{tpu_custom_call.1}
  #allocation0 [shape = 'u32[]', space=smem, size = 0x4, offset = 0x4, fixed_abs, tag = 'smem constant byte address 0x4 - core index']
  #allocation1 [shape = 'u32[72,128]{1,0:T(1,128)}', space=vmem, size = 0x9000, scoped, tag = 'internal scratch']
  %s0 = inlined_call_operand.hbm [shape: f32[16,8,128], index: 0, kind: input, shape index: {}]
  %s1 = inlined_call_operand.hbm [shape: f32[128,128], index: 1, kind: input, shape index: {}]
  %s2 = inlined_call_operand.hbm [shape: f32[1,8,128], index: 2, kind: input, shape index: {}]
  %s3 = inlined_call_operand.hbm [shape: f32[16,128], index: 3, kind: output, shape index: {}]
  %s4 = sld [smem:[#allocation0]]
  $region57: #{tpu_custom_call.1} parent=0
    _
  %s6 = ssub.s32 1, %s4
  %s7 = scalar_select 0, %s6, %s4
  $region1: #{tpu_custom_call.1} parent=0
    #allocation2 [shape = 'u8[65536]{0}', space=vmem, size = 0x10000, scoped, tag = 'input window, operand 0']
    #allocation3 [shape = 's32[2]{0}', space=sflag, size = 0x8, scoped, tag = 'scoped memory for tpu_custom_call.1']
    #allocation4 [shape = 's32[2]{0}', space=sflag, size = 0x8, scoped, tag = 'scoped memory for tpu_custom_call.1']
    #allocation5 [shape = 'u8[65536]{0}', space=vmem, size = 0x10000, scoped, tag = 'input window, operand 1, single buffered']
    #allocation6 [shape = 's32[1]{0}', space=sflag, size = 0x4, scoped, tag = 'scoped memory for tpu_custom_call.1']
    #allocation7 [shape = 'u8[4096]{0}', space=vmem, size = 0x1000, scoped, tag = 'input window, operand 2, single buffered']
    #allocation8 [shape = 'u8[8192]{0}', space=vmem, size = 0x2000, scoped, tag = 'output window, operand 0']
    %8 = vsyncpa [#allocation3], 0
    %s9 = scalar_lea.sflag [#allocation3], 1
    %10 = vsyncpa %s9, 0
    %11 = vsyncpa [#allocation6], 0
    %12 = vsyncpa [#allocation4], 0
    %s13 = scalar_lea.sflag [#allocation4], 1
    %14 = vsyncpa %s13, 0
    loop: start=0, step=1, limit=4
    $region2: #{tpu_custom_call.1} parent=1 // loop_pre_header
      _
    $region3: #{tpu_custom_call.1} parent=1 // loop_header
      %s16 = sphi 0, %s20
      %p17 = scmp.ge.s32.totalorder %s16, 4
      %s26 = sphi 0, %s28
      %s29 = sphi 0, %s26
      %s30 = sphi 0, %s29
      %s46 = sphi 0, %s30
      %s50 = sphi 0, %s50
      %s52 = sphi 0, %s50
      %s53 = sphi 0, %s52
      %s67 = sphi 0, %s53
      %s71 = sphi 0, %s71
      %s73 = sphi 0, %s71
      %s74 = sphi 0, %s73
      %s88 = sphi 0, %s74
      %s94 = sphi 0, %s96
      %s97 = sphi 0, %s94
      %s98 = sphi 0, %s97
      %s114 = sphi 0, %s98
    $region4: #{tpu_custom_call.1} parent=1 // loop_header_branch
      %19 = sbr.rel (%p17) target = $region8
    $region5: #{tpu_custom_call.1} parent=1 // loop_body
      %s21 = ssub.s32 %s16, 1
      %s22 = ssub.s32 %s16, 2
      %s23 = sadd.s32 %s16, 1
      %s24 = ssub.s32 %s16, %s23
      %p25 = scmp.eq.s32.totalorder %s24, 0
      %s27 = sadd.s32 %s26, 1
      %s28 = scalar_select %p25, %s26, %s27
      %p31 = pneg %p25
      %p32 = scmp.eq.s32.totalorder %s16, 1
      %p33 = por %p31, %p32
      %p34 = scmp.ne.s32.totalorder %s26, %s29
      %p35 = scmp.eq.s32.totalorder %s16, 0
      %p36 = por %p34, %p35
      %p37 = scmp.ne.s32.totalorder %s26, %s29
      %p38 = scmp.eq.s32.totalorder %s21, 1
      %p39 = por %p37, %p38
      %p40 = scmp.ne.s32.totalorder %s29, %s30
      %p41 = scmp.eq.s32.totalorder %s21, 0
      %p42 = por %p40, %p41
      %p43 = scmp.ne.s32.totalorder %s29, %s30
      %p44 = scmp.eq.s32.totalorder %s22, 1
      %p45 = por %p43, %p44
      %p47 = scmp.ne.s32.totalorder %s30, %s46
      %p48 = scmp.eq.s32.totalorder %s22, 0
      %p49 = por %p47, %p48
      %s51 = sadd.s32 %s50, 1
      %p54 = scmp.eq.s32.totalorder %s16, 1
      %p55 = scmp.ne.s32.totalorder %s50, %s52
      %p56 = scmp.eq.s32.totalorder %s16, 0
      %p57 = por %p55, %p56
      %p58 = scmp.ne.s32.totalorder %s50, %s52
      %p59 = scmp.eq.s32.totalorder %s21, 1
      %p60 = por %p58, %p59
      %p61 = scmp.ne.s32.totalorder %s52, %s53
      %p62 = scmp.eq.s32.totalorder %s21, 0
      %p63 = por %p61, %p62
      %p64 = scmp.ne.s32.totalorder %s52, %s53
      %p65 = scmp.eq.s32.totalorder %s22, 1
      %p66 = por %p64, %p65
      %p68 = scmp.ne.s32.totalorder %s53, %s67
      %p69 = scmp.eq.s32.totalorder %s22, 0
      %p70 = por %p68, %p69
      %s72 = sadd.s32 %s71, 1
      %p75 = scmp.eq.s32.totalorder %s16, 1
      %p76 = scmp.ne.s32.totalorder %s71, %s73
      %p77 = scmp.eq.s32.totalorder %s16, 0
      %p78 = por %p76, %p77
      %p79 = scmp.ne.s32.totalorder %s71, %s73
      %p80 = scmp.eq.s32.totalorder %s21, 1
      %p81 = por %p79, %p80
      %p82 = scmp.ne.s32.totalorder %s73, %s74
      %p83 = scmp.eq.s32.totalorder %s21, 0
      %p84 = por %p82, %p83
      %p85 = scmp.ne.s32.totalorder %s73, %s74
      %p86 = scmp.eq.s32.totalorder %s22, 1
      %p87 = por %p85, %p86
      %p89 = scmp.ne.s32.totalorder %s74, %s88
      %p90 = scmp.eq.s32.totalorder %s22, 0
      %p91 = por %p89, %p90
      %s92 = ssub.s32 %s16, %s23
      %p93 = scmp.eq.s32.totalorder %s92, 0
      %s95 = sadd.s32 %s94, 1
      %s96 = scalar_select %p93, %s94, %s95
      %p99 = pneg %p93
      %p100 = scmp.eq.s32.totalorder %s16, 1
      %p101 = por %p99, %p100
      %p102 = scmp.ne.s32.totalorder %s94, %s97
      %p103 = scmp.eq.s32.totalorder %s16, 0
      %p104 = por %p102, %p103
      %p105 = scmp.ne.s32.totalorder %s94, %s97
      %p106 = scmp.eq.s32.totalorder %s21, 1
      %p107 = por %p105, %p106
      %p108 = scmp.ne.s32.totalorder %s97, %s98
      %p109 = scmp.eq.s32.totalorder %s21, 0
      %p110 = por %p108, %p109
      %p111 = scmp.ne.s32.totalorder %s97, %s98
      %p112 = scmp.eq.s32.totalorder %s22, 1
      %p113 = por %p111, %p112
      %p115 = scmp.ne.s32.totalorder %s98, %s114
      %p116 = scmp.eq.s32.totalorder %s22, 0
      %p117 = por %p115, %p116
      %p118 = scmp.le.s32.totalorder 1, %s16
      %p119 = scmp.lt.s32.totalorder %s16, 3
      %p120 = pnand %p118, %p119
      %p121 = pneg %p120
      // Predicated region
      $region9: #{tpu_custom_call.1} parent=5 // pred_check
        _
      $region10: #{tpu_custom_call.1} parent=5 // pred_check_branch
        %123 = sbr.rel (%p120) target = $region12
      $region11: #{tpu_custom_call.1} parent=5 // pred_region
        %s124 = ssub.s32 %s16, 1
        // Predicated region
        $region13: #{tpu_custom_call.1} parent=11 // pred_check
          %p125 = pneg %p63
        $region14: #{tpu_custom_call.1} parent=11 // pred_check_branch
          %127 = sbr.rel (%p125) target = $region16
        $region15: #{tpu_custom_call.1} parent=11 // pred_region
          %129 = vsyncadd [#allocation6], 0
          %s130 = sshll.u32 %s1, 4
          %s131 = int_to_ptr.hbm [resolvable:$true] %s130
          %s132 = sshll.u32 [#allocation5], 4
          %s133 = int_to_ptr.vmem [resolvable:$true] %s132
          %138 = dma.hbm_to_vmem [thread:$0]  %s131, 2048, %s133, [#allocation6], 128, 128, 8
        $region16: #{tpu_custom_call.1} parent=11 // pred_fallthru
          _
        // Predicated region
        $region17: #{tpu_custom_call.1} parent=11 // pred_check
          %p139 = pneg %p84
        $region18: #{tpu_custom_call.1} parent=11 // pred_check_branch
          %141 = sbr.rel (%p139) target = $region20
        $region19: #{tpu_custom_call.1} parent=11 // pred_region
          %143 = vsyncadd [#allocation6], 0
          %s145 = sshll.u32 %s2, 4
          %s146 = int_to_ptr.hbm [resolvable:$true] %s145
          %s147 = sshll.u32 [#allocation7], 4
          %s148 = int_to_ptr.vmem [resolvable:$true] %s147
          %150 = dma.hbm_to_vmem [thread:$0]  %s146, 128, %s148, [#allocation6]
        $region20: #{tpu_custom_call.1} parent=11 // pred_fallthru
          _
      $region12: #{tpu_custom_call.1} parent=5 // pred_fallthru
        _
      %p151 = scmp.lt.s32.totalorder %s16, 2
      // Predicated region
      $region21: #{tpu_custom_call.1} parent=5 // pred_check
        %p152 = pneg %p151
      $region22: #{tpu_custom_call.1} parent=5 // pred_check_branch
        %154 = sbr.rel (%p152) target = $region24
      $region23: #{tpu_custom_call.1} parent=5 // pred_region
        // Predicated region
        $region25: #{tpu_custom_call.1} parent=23 // pred_check
          %p155 = pneg %p36
        $region26: #{tpu_custom_call.1} parent=23 // pred_check_branch
          %157 = sbr.rel (%p155) target = $region28
        $region27: #{tpu_custom_call.1} parent=23 // pred_region
          %s158 = sand.u32 %s26, 1
          %s159 = scalar_lea.sflag [#allocation3], %s158
          %s160 = sand.u32 %s26, 1
          %s161 = smul.addr %s160, 64
          %s162 = scalar_lea.vmem [#allocation2], %s161
          %s163 = smul.u32 8, %s16
          %165 = vsyncadd %s159, 0
          %s166 = smul.addr %s163, 8
          %s167 = scalar_lea.hbm %s0, %s166
          %s168 = sshll.u32 %s167, 4
          %s169 = int_to_ptr.hbm [resolvable:$true] %s168
          %s170 = sshll.u32 %s162, 4
          %s171 = int_to_ptr.vmem [resolvable:$true] %s170
          %176 = dma.hbm_to_vmem [thread:$0]  %s169, 1024, %s171, %s159, 128, 128, 8
        $region28: #{tpu_custom_call.1} parent=23 // pred_fallthru
          _
      $region24: #{tpu_custom_call.1} parent=5 // pred_fallthru
        _
      %p177 = scmp.le.s32.totalorder 1, %s16
      %p178 = scmp.lt.s32.totalorder %s16, 3
      %p179 = pnand %p177, %p178
      %p180 = pneg %p179
      // Predicated region
      $region29: #{tpu_custom_call.1} parent=5 // pred_check
        _
      $region30: #{tpu_custom_call.1} parent=5 // pred_check_branch
        %182 = sbr.rel (%p179) target = $region32
      $region31: #{tpu_custom_call.1} parent=5 // pred_region
        %s183 = ssub.s32 %s16, 1
        %s184 = sand.u32 %s29, 1
        %s185 = scalar_lea.sflag [#allocation3], %s184
        %s186 = sand.u32 %s29, 1
        %s187 = smul.addr %s186, 64
        %s188 = scalar_lea.vmem [#allocation2], %s187
        // Predicated region
        $region33: #{tpu_custom_call.1} parent=31 // pred_check
          %p189 = pneg %p42
        $region34: #{tpu_custom_call.1} parent=31 // pred_check_branch
          %191 = sbr.rel (%p189) target = $region36
        $region35: #{tpu_custom_call.1} parent=31 // pred_region
          %193 = dma.done %s185, 1024
        $region36: #{tpu_custom_call.1} parent=31 // pred_fallthru
          _
        // Predicated region
        $region37: #{tpu_custom_call.1} parent=31 // pred_check
          %p194 = pneg %p63
        $region38: #{tpu_custom_call.1} parent=31 // pred_check_branch
          %196 = sbr.rel (%p194) target = $region40
        $region39: #{tpu_custom_call.1} parent=31 // pred_region
          %198 = dma.done [#allocation6], 2048
        $region40: #{tpu_custom_call.1} parent=31 // pred_fallthru
          _
        // Predicated region
        $region41: #{tpu_custom_call.1} parent=31 // pred_check
          %p199 = pneg %p84
        $region42: #{tpu_custom_call.1} parent=31 // pred_check_branch
          %201 = sbr.rel (%p199) target = $region44
        $region43: #{tpu_custom_call.1} parent=31 // pred_region
          %203 = dma.done [#allocation6], 128
        $region44: #{tpu_custom_call.1} parent=31 // pred_fallthru
          _
        %s204 = sand.u32 %s29, 1
        %s205 = scalar_lea.sflag [#allocation3], %s204
        %s206 = sand.u32 %s29, 1
        %s207 = smul.addr %s206, 64
        %s208 = scalar_lea.vmem [#allocation2], %s207
        %p209 = pneg %p42
        %p210 = pneg %p39
        %p211 = pneg %p63
        %p212 = pneg %p60
        %p213 = pneg %p84
        %p214 = pneg %p81
        %p215 = pneg %p110
        %p216 = pneg %p107
        %s217 = sand.u32 %s97, 1
        %s218 = scalar_lea.sflag [#allocation4], %s217
        %s219 = sand.u32 %s97, 1
        %s220 = smul.addr %s219, 8
        %s221 = scalar_lea.vmem [#allocation8], %s220
        %s222 = smul.u32 8, %s21
        %v223 = vld [vmem:[#allocation5] sm:$0xff]
        %v224 = vld [vmem:[#allocation5 + $0x8] sm:$0xff]
        %v225 = vld [vmem:[#allocation5 + $0x10] sm:$0xff]
        %v226 = vld [vmem:[#allocation5 + $0x18] sm:$0xff]
        %v227 = vld [vmem:[#allocation5 + $0x20] sm:$0xff]
        %v228 = vld [vmem:[#allocation5 + $0x28] sm:$0xff]
        %v229 = vld [vmem:[#allocation5 + $0x30] sm:$0xff]
        %v230 = vld [vmem:[#allocation5 + $0x38] sm:$0xff]
        %v231 = vld [vmem:[#allocation5 + $0x40] sm:$0xff]
        %v232 = vld [vmem:[#allocation5 + $0x48] sm:$0xff]
        %v233 = vld [vmem:[#allocation5 + $0x50] sm:$0xff]
        %v234 = vld [vmem:[#allocation5 + $0x58] sm:$0xff]
        %v235 = vld [vmem:[#allocation5 + $0x60] sm:$0xff]
        %v236 = vld [vmem:[#allocation5 + $0x68] sm:$0xff]
        %v237 = vld [vmem:[#allocation5 + $0x70] sm:$0xff]
        %v238 = vld [vmem:[#allocation5 + $0x78] sm:$0xff]
        %v239 = vld [vmem:[#allocation7] sm:$0xff]
        %s240 = smul.u32 0, 8
        %s241 = scalar_lea.vmem %s188, %s240 [#allocation2]
        %v242 = vld [vmem:[%s241] sm:$0xff]
        %v243 = vld [vmem:[%s241 + $0x8] sm:$0xff]
        %v244 = vld [vmem:[%s241 + $0x10] sm:$0xff]
        %v245 = vld [vmem:[%s241 + $0x18] sm:$0xff]
        %v246 = vld [vmem:[%s241 + $0x20] sm:$0xff]
        %v247 = vld [vmem:[%s241 + $0x28] sm:$0xff]
        %v248 = vld [vmem:[%s241 + $0x30] sm:$0xff]
        %v249 = vld [vmem:[%s241 + $0x38] sm:$0xff]
        %250 = vmatpush.msra.mxu0 %v238
        %251 = vmatpush.msra.mxu0 %v237
        %252 = vmatpush.msra.mxu0 %v236
        %253 = vmatpush.msra.mxu0 %v235
        %254 = vmatpush.msra.mxu0 %v234
        %255 = vmatpush.msra.mxu0 %v233
        %256 = vmatpush.msra.mxu0 %v232
        %257 = vmatpush.msra.mxu0 %v231
        %258 = vmatpush.msra.mxu0 %v230
        %259 = vmatpush.msra.mxu0 %v229
        %260 = vmatpush.msra.mxu0 %v228
        %261 = vmatpush.msra.mxu0 %v227
        %262 = vmatpush.msra.mxu0 %v226
        %263 = vmatpush.msra.mxu0 %v225
        %264 = vmatpush.msra.mxu0 %v224
        %265 = vmatpush.msra.mxu0 %v223
        %266 = vmatmul.f32.gmra.mxu0 %v242
        %v267 = vpop.f32.mrf.mxu0
        %v268 = vadd.f32 0.0, %v267
        %269 = vmatmul.f32.gmra.mxu0 %v243
        %v270 = vpop.f32.mrf.mxu0
        %v271 = vadd.f32 0.0, %v270
        %272 = vmatmul.f32.gmra.mxu0 %v244
        %v273 = vpop.f32.mrf.mxu0
        %v274 = vadd.f32 0.0, %v273
        %275 = vmatmul.f32.gmra.mxu0 %v245
        %v276 = vpop.f32.mrf.mxu0
        %v277 = vadd.f32 0.0, %v276
        %278 = vmatmul.f32.gmra.mxu0 %v246
        %v279 = vpop.f32.mrf.mxu0
        %v280 = vadd.f32 0.0, %v279
        %281 = vmatmul.f32.gmra.mxu0 %v247
        %v282 = vpop.f32.mrf.mxu0
        %v283 = vadd.f32 0.0, %v282
        %284 = vmatmul.f32.gmra.mxu0 %v248
        %v285 = vpop.f32.mrf.mxu0
        %v286 = vadd.f32 0.0, %v285
        %287 = vmatmul.f32.gmra.mxu0 %v249
        %v288 = vpop.f32.mrf.mxu0
        %v289 = vadd.f32 0.0, %v288
        %290 = vdwg.mxu0
        %v291 = vadd.f32 %v268, %v239
        %v292 = vadd.f32 %v271, %v239
        %v293 = vadd.f32 %v274, %v239
        %v294 = vadd.f32 %v277, %v239
        %v295 = vadd.f32 %v280, %v239
        %v296 = vadd.f32 %v283, %v239
        %v297 = vadd.f32 %v286, %v239
        %v298 = vadd.f32 %v289, %v239
        %v299 = vtanh.pop %v291
        %v300 = vtanh.pop %v292
        %v301 = vtanh.pop %v293
        %v302 = vtanh.pop %v294
        %v303 = vtanh.pop %v295
        %v304 = vtanh.pop %v296
        %v305 = vtanh.pop %v297
        %v306 = vtanh.pop %v298
        %v307 = vmul.f32 %v299, 1.442695
        %v308 = vpow.pop %v307
        %v309 = vmul.f32 %v300, 1.442695
        %v310 = vpow.pop %v309
        %v311 = vmul.f32 %v301, 1.442695
        %v312 = vpow.pop %v311
        %v313 = vmul.f32 %v302, 1.442695
        %v314 = vpow.pop %v313
        %v315 = vmul.f32 %v303, 1.442695
        %v316 = vpow.pop %v315
        %v317 = vmul.f32 %v304, 1.442695
        %v318 = vpow.pop %v317
        %v319 = vmul.f32 %v305, 1.442695
        %v320 = vpow.pop %v319
        %v321 = vmul.f32 %v306, 1.442695
        %v322 = vpow.pop %v321
        %v323 = vrot.slane %v308, 4
        %v324 = vadd.f32 %v308, %v323
        %v325 = vrot.slane %v324, 2
        %v326 = vadd.f32 %v324, %v325
        %v327 = vrot.slane %v326, 1
        %v328 = vadd.f32 %v326, %v327
        %v329 = vrot.slane %v310, 4
        %v330 = vadd.f32 %v310, %v329
        %v331 = vrot.slane %v330, 2
        %v332 = vadd.f32 %v330, %v331
        %v333 = vrot.slane %v332, 1
        %v334 = vadd.f32 %v332, %v333
        %v335 = vrot.slane %v312, 4
        %v336 = vadd.f32 %v312, %v335
        %v337 = vrot.slane %v336, 2
        %v338 = vadd.f32 %v336, %v337
        %v339 = vrot.slane %v338, 1
        %v340 = vadd.f32 %v338, %v339
        %v341 = vrot.slane %v314, 4
        %v342 = vadd.f32 %v314, %v341
        %v343 = vrot.slane %v342, 2
        %v344 = vadd.f32 %v342, %v343
        %v345 = vrot.slane %v344, 1
        %v346 = vadd.f32 %v344, %v345
        %v347 = vrot.slane %v316, 4
        %v348 = vadd.f32 %v316, %v347
        %v349 = vrot.slane %v348, 2
        %v350 = vadd.f32 %v348, %v349
        %v351 = vrot.slane %v350, 1
        %v352 = vadd.f32 %v350, %v351
        %v353 = vrot.slane %v318, 4
        %v354 = vadd.f32 %v318, %v353
        %v355 = vrot.slane %v354, 2
        %v356 = vadd.f32 %v354, %v355
        %v357 = vrot.slane %v356, 1
        %v358 = vadd.f32 %v356, %v357
        %v359 = vrot.slane %v320, 4
        %v360 = vadd.f32 %v320, %v359
        %v361 = vrot.slane %v360, 2
        %v362 = vadd.f32 %v360, %v361
        %v363 = vrot.slane %v362, 1
        %v364 = vadd.f32 %v362, %v363
        %v365 = vrot.slane %v322, 4
        %v366 = vadd.f32 %v322, %v365
        %v367 = vrot.slane %v366, 2
        %v368 = vadd.f32 %v366, %v367
        %v369 = vrot.slane %v368, 1
        %v370 = vadd.f32 %v368, %v369
        %v371 = vrcp.pop %v328
        %v372 = vmul.f32 %v328, %v371
        %v373 = vsub.f32 1.0, %v372
        %v374 = vmul.f32 %v371, %v373
        %v375 = vadd.f32 %v371, %v374
        %vm376 = vweird.f32 %v328
        %vm377 = vweird.f32 %v371
        %vm378 = vmor %vm376, %vm377
        %v379 = vsel %vm378, %v371, %v375
        %v380 = vand.u32 2147483647, %v328
        %vm381 = vcmp.eq.f32.partialorder %v380, 8.507059e+37
        %v382 = vand.u32 %v328, 2147483648
        %v383 = vor.u32 1.1754944e-38, %v382
        %v384 = vsel %vm381, %v383, %v379
        %v385 = vmul.f32 %v308, %v384
        %v386 = vrcp.pop %v334
        %v387 = vmul.f32 %v334, %v386
        %v388 = vsub.f32 1.0, %v387
        %v389 = vmul.f32 %v386, %v388
        %v390 = vadd.f32 %v386, %v389
        %vm391 = vweird.f32 %v334
        %vm392 = vweird.f32 %v386
        %vm393 = vmor %vm391, %vm392
        %v394 = vsel %vm393, %v386, %v390
        %v395 = vand.u32 2147483647, %v334
        %vm396 = vcmp.eq.f32.partialorder %v395, 8.507059e+37
        %v397 = vand.u32 %v334, 2147483648
        %v398 = vor.u32 1.1754944e-38, %v397
        %v399 = vsel %vm396, %v398, %v394
        %v400 = vmul.f32 %v310, %v399
        %v401 = vrcp.pop %v340
        %v402 = vmul.f32 %v340, %v401
        %v403 = vsub.f32 1.0, %v402
        %v404 = vmul.f32 %v401, %v403
        %v405 = vadd.f32 %v401, %v404
        %vm406 = vweird.f32 %v340
        %vm407 = vweird.f32 %v401
        %vm408 = vmor %vm406, %vm407
        %v409 = vsel %vm408, %v401, %v405
        %v410 = vand.u32 2147483647, %v340
        %vm411 = vcmp.eq.f32.partialorder %v410, 8.507059e+37
        %v412 = vand.u32 %v340, 2147483648
        %v413 = vor.u32 1.1754944e-38, %v412
        %v414 = vsel %vm411, %v413, %v409
        %v415 = vmul.f32 %v312, %v414
        %v416 = vrcp.pop %v346
        %v417 = vmul.f32 %v346, %v416
        %v418 = vsub.f32 1.0, %v417
        %v419 = vmul.f32 %v416, %v418
        %v420 = vadd.f32 %v416, %v419
        %vm421 = vweird.f32 %v346
        %vm422 = vweird.f32 %v416
        %vm423 = vmor %vm421, %vm422
        %v424 = vsel %vm423, %v416, %v420
        %v425 = vand.u32 2147483647, %v346
        %vm426 = vcmp.eq.f32.partialorder %v425, 8.507059e+37
        %v427 = vand.u32 %v346, 2147483648
        %v428 = vor.u32 1.1754944e-38, %v427
        %v429 = vsel %vm426, %v428, %v424
        %v430 = vmul.f32 %v314, %v429
        %v431 = vrcp.pop %v352
        %v432 = vmul.f32 %v352, %v431
        %v433 = vsub.f32 1.0, %v432
        %v434 = vmul.f32 %v431, %v433
        %v435 = vadd.f32 %v431, %v434
        %vm436 = vweird.f32 %v352
        %vm437 = vweird.f32 %v431
        %vm438 = vmor %vm436, %vm437
        %v439 = vsel %vm438, %v431, %v435
        %v440 = vand.u32 2147483647, %v352
        %vm441 = vcmp.eq.f32.partialorder %v440, 8.507059e+37
        %v442 = vand.u32 %v352, 2147483648
        %v443 = vor.u32 1.1754944e-38, %v442
        %v444 = vsel %vm441, %v443, %v439
        %v445 = vmul.f32 %v316, %v444
        %v446 = vrcp.pop %v358
        %v447 = vmul.f32 %v358, %v446
        %v448 = vsub.f32 1.0, %v447
        %v449 = vmul.f32 %v446, %v448
        %v450 = vadd.f32 %v446, %v449
        %vm451 = vweird.f32 %v358
        %vm452 = vweird.f32 %v446
        %vm453 = vmor %vm451, %vm452
        %v454 = vsel %vm453, %v446, %v450
        %v455 = vand.u32 2147483647, %v358
        %vm456 = vcmp.eq.f32.partialorder %v455, 8.507059e+37
        %v457 = vand.u32 %v358, 2147483648
        %v458 = vor.u32 1.1754944e-38, %v457
        %v459 = vsel %vm456, %v458, %v454
        %v460 = vmul.f32 %v318, %v459
        %v461 = vrcp.pop %v364
        %v462 = vmul.f32 %v364, %v461
        %v463 = vsub.f32 1.0, %v462
        %v464 = vmul.f32 %v461, %v463
        %v465 = vadd.f32 %v461, %v464
        %vm466 = vweird.f32 %v364
        %vm467 = vweird.f32 %v461
        %vm468 = vmor %vm466, %vm467
        %v469 = vsel %vm468, %v461, %v465
        %v470 = vand.u32 2147483647, %v364
        %vm471 = vcmp.eq.f32.partialorder %v470, 8.507059e+37
        %v472 = vand.u32 %v364, 2147483648
        %v473 = vor.u32 1.1754944e-38, %v472
        %v474 = vsel %vm471, %v473, %v469
        %v475 = vmul.f32 %v320, %v474
        %v476 = vrcp.pop %v370
        %v477 = vmul.f32 %v370, %v476
        %v478 = vsub.f32 1.0, %v477
        %v479 = vmul.f32 %v476, %v478
        %v480 = vadd.f32 %v476, %v479
        %vm481 = vweird.f32 %v370
        %vm482 = vweird.f32 %v476
        %vm483 = vmor %vm481, %vm482
        %v484 = vsel %vm483, %v476, %v480
        %v485 = vand.u32 2147483647, %v370
        %vm486 = vcmp.eq.f32.partialorder %v485, 8.507059e+37
        %v487 = vand.u32 %v370, 2147483648
        %v488 = vor.u32 1.1754944e-38, %v487
        %v489 = vsel %vm486, %v488, %v484
        %v490 = vmul.f32 %v322, %v489
        %v491 = vadd.f32 %v385, 1e-10
        %v492 = vadd.f32 %v400, 1e-10
        %v493 = vadd.f32 %v415, 1e-10
        %v494 = vadd.f32 %v430, 1e-10
        %v495 = vadd.f32 %v445, 1e-10
        %v496 = vadd.f32 %v460, 1e-10
        %v497 = vadd.f32 %v475, 1e-10
        %v498 = vadd.f32 %v490, 1e-10
        %v499 = vmul.f32 %v242, %v491
        %v500 = vmul.f32 %v243, %v492
        %v501 = vmul.f32 %v244, %v493
        %v502 = vmul.f32 %v245, %v494
        %v503 = vmul.f32 %v246, %v495
        %v504 = vmul.f32 %v247, %v496
        %v505 = vmul.f32 %v248, %v497
        %v506 = vmul.f32 %v249, %v498
        %v507 = vrot.slane %v499, 4
        %v508 = vadd.f32 %v499, %v507
        %v509 = vrot.slane %v508, 2
        %v510 = vadd.f32 %v508, %v509
        %v511 = vrot.slane %v510, 1
        %v512 = vadd.f32 %v510, %v511
        %v513 = vrot.slane %v500, 4
        %v514 = vadd.f32 %v500, %v513
        %v515 = vrot.slane %v514, 2
        %v516 = vadd.f32 %v514, %v515
        %v517 = vrot.slane %v516, 1
        %v518 = vadd.f32 %v516, %v517
        %v519 = vrot.slane %v501, 4
        %v520 = vadd.f32 %v501, %v519
        %v521 = vrot.slane %v520, 2
        %v522 = vadd.f32 %v520, %v521
        %v523 = vrot.slane %v522, 1
        %v524 = vadd.f32 %v522, %v523
        %v525 = vrot.slane %v502, 4
        %v526 = vadd.f32 %v502, %v525
        %v527 = vrot.slane %v526, 2
        %v528 = vadd.f32 %v526, %v527
        %v529 = vrot.slane %v528, 1
        %v530 = vadd.f32 %v528, %v529
        %v531 = vrot.slane %v503, 4
        %v532 = vadd.f32 %v503, %v531
        %v533 = vrot.slane %v532, 2
        %v534 = vadd.f32 %v532, %v533
        %v535 = vrot.slane %v534, 1
        %v536 = vadd.f32 %v534, %v535
        %v537 = vrot.slane %v504, 4
        %v538 = vadd.f32 %v504, %v537
        %v539 = vrot.slane %v538, 2
        %v540 = vadd.f32 %v538, %v539
        %v541 = vrot.slane %v540, 1
        %v542 = vadd.f32 %v540, %v541
        %v543 = vrot.slane %v505, 4
        %v544 = vadd.f32 %v505, %v543
        %v545 = vrot.slane %v544, 2
        %v546 = vadd.f32 %v544, %v545
        %v547 = vrot.slane %v546, 1
        %v548 = vadd.f32 %v546, %v547
        %v549 = vrot.slane %v506, 4
        %v550 = vadd.f32 %v506, %v549
        %v551 = vrot.slane %v550, 2
        %v552 = vadd.f32 %v550, %v551
        %v553 = vrot.slane %v552, 1
        %v554 = vadd.f32 %v552, %v553
        %vm563 = vcmask 1041409
        %v564 = vsel %vm563, %v518, %v512
        %vm565 = vcmask 1042434
        %v566 = vsel %vm565, %v524, %v564
        %vm567 = vcmask 1043459
        %v568 = vsel %vm567, %v530, %v566
        %vm569 = vcmask 1044484
        %v570 = vsel %vm569, %v536, %v568
        %vm571 = vcmask 1045509
        %v572 = vsel %vm571, %v542, %v570
        %vm573 = vcmask 1046534
        %v574 = vsel %vm573, %v548, %v572
        %vm575 = vcmask 1047559
        %v576 = vsel %vm575, %v554, %v574
        %578 = vst [vmem:[%s221] sm:$0xff] %v576
        %s579 = sand.u32 %s97, 1
        %s580 = scalar_lea.sflag [#allocation4], %s579
        %s581 = sand.u32 %s97, 1
        %s582 = smul.addr %s581, 8
        %s583 = scalar_lea.vmem [#allocation8], %s582
        // Predicated region
        $region45: #{tpu_custom_call.1} parent=31 // pred_check
          %p584 = pneg %p107
        $region46: #{tpu_custom_call.1} parent=31 // pred_check_branch
          %586 = sbr.rel (%p584) target = $region48
        $region47: #{tpu_custom_call.1} parent=31 // pred_region
          %588 = vsyncadd %s580, 0
          %s589 = smul.addr %s21, 8
          %s590 = scalar_lea.hbm %s3, %s589
          %s592 = sshll.u32 %s583, 4
          %s593 = int_to_ptr.vmem [resolvable:$true] %s592
          %s594 = sshll.u32 %s590, 4
          %s595 = int_to_ptr.hbm [resolvable:$true] %s594
          %597 = dma.vmem_to_hbm [thread:$0]  %s593, 128, %s595, %s580
        $region48: #{tpu_custom_call.1} parent=31 // pred_fallthru
          _
      $region32: #{tpu_custom_call.1} parent=5 // pred_fallthru
        _
      %p598 = scmp.le.s32.totalorder 2, %s16
      // Predicated region
      $region49: #{tpu_custom_call.1} parent=5 // pred_check
        %p599 = pneg %p598
      $region50: #{tpu_custom_call.1} parent=5 // pred_check_branch
        %601 = sbr.rel (%p599) target = $region52
      $region51: #{tpu_custom_call.1} parent=5 // pred_region
        %s602 = ssub.s32 %s16, 2
        // Predicated region
        $region53: #{tpu_custom_call.1} parent=51 // pred_check
          %p603 = pneg %p113
        $region54: #{tpu_custom_call.1} parent=51 // pred_check_branch
          %605 = sbr.rel (%p603) target = $region56
        $region55: #{tpu_custom_call.1} parent=51 // pred_region
          %s606 = sand.u32 %s98, 1
          %s607 = scalar_lea.sflag [#allocation4], %s606
          %s608 = sand.u32 %s98, 1
          %s609 = smul.addr %s608, 8
          %s610 = scalar_lea.vmem [#allocation8], %s609
          %612 = dma.done %s607, 128
        $region56: #{tpu_custom_call.1} parent=51 // pred_fallthru
          _
      $region52: #{tpu_custom_call.1} parent=5 // pred_fallthru
        _
    $region6: #{tpu_custom_call.1} parent=1 // loop_footer
      %s20 = sadd.s32 1, %s16
    $region7: #{tpu_custom_call.1} parent=1 // loop_footer_branch
      %15 = sbr.rel target = $region3
    $region8: #{tpu_custom_call.1} parent=1 // loop_exit
      _
    %613 = vsyncpa [#allocation3], 1
    %s614 = scalar_lea.sflag [#allocation3], 1
    %615 = vsyncpa %s614, 1
    %616 = vsyncpa [#allocation6], 1
    %617 = vsyncpa [#allocation4], 1
    %s618 = scalar_lea.sflag [#allocation4], 1
    %619 = vsyncpa %s618, 1

</llo_original>
